<compile_context>
chip_gen: v5e
topology: v5e:2x2
jax: 0.10.0
libtpu: 0.0.40
codegen_flags: <defaults>
</compile_context>

<pallas_src>
import functools

import jax
import jax.numpy as jnp
import numpy as np
from jax.experimental import pallas as pl
from jax.experimental.pallas import tpu as pltpu


def _round_up(a: int, b: int) -> int:
    return (a + b - 1) // b * b


def _conv_stats_kernel(w_ref, xcol_ref, y_ref, stats_ref):
    """Pass 1: conv tile as a single MXU matmul + accumulate per-channel sum / sumsq.

    w_ref:     (C2, KCp)      flattened conv weights (zero-padded contraction dim)
    xcol_ref:  (KCp, TL)      im2col tile (columns = N*L_out, zero-padded, lane-dense)
    y_ref:     (C2, TL)       conv output tile (written to HBM for pass 2)
    stats_ref: (2, C2, 1)     resident accumulator: [0]=sum, [1]=sum of squares
    """
    t = pl.program_id(0)

    @pl.when(t == 0)
    def _():
        stats_ref[...] = jnp.zeros_like(stats_ref)

    # Conv bias intentionally omitted: it cancels exactly in training-mode BatchNorm.
    y = jnp.dot(w_ref[...], xcol_ref[...], preferred_element_type=jnp.float32)
    y_ref[...] = y

    # Zero-padded columns contribute 0 to both sums -> stats over valid columns are exact.
    stats_ref[0] += jnp.sum(y, axis=1, keepdims=True)
    stats_ref[1] += jnp.sum(y * y, axis=1, keepdims=True)


def _bn_glu_kernel(stats_ref, params_ref, y_ref, o_ref, *, count, c_out, eps):
    """Pass 2: BatchNorm (gamma fused into the scale) + GLU along the channel axis.

    stats_ref:  (2, C2, 1)   [0]=sum, [1]=sumsq over the valid (N, L) positions
    params_ref: (2, C2, 1)   [0]=gamma, [1]=beta
    y_ref:      (C2, TL)     conv output tile
    o_ref:      (C_out, TL)  GLU output tile
    """
    inv_n = 1.0 / count
    mean = stats_ref[0] * inv_n                                    # (C2, 1)
    var = jnp.maximum(stats_ref[1] * inv_n - mean * mean, 0.0)     # biased batch variance
    gamma = params_ref[0]                                          # (C2, 1)
    beta = params_ref[1]                                           # (C2, 1)
    scale = gamma * jax.lax.rsqrt(var + eps)                       # gamma fused into scale
    shift = beta - mean * scale
    z = y_ref[...] * scale + shift                                 # (C2, TL)
    o_ref[...] = z[:c_out, :] * jax.nn.sigmoid(z[c_out:, :])       # GLU(dim=channels)


def conv1d_bn_glu(x, weight, bias, gamma, beta, *, padding=0, eps=1e-5):
    """Forward of Conv1d(bias) -> BatchNorm1d(training batch stats) -> GLU(dim=1).

    x:      (N, C_in, L)       f32
    weight: (2*C_out, C_in, K) f32
    bias:   (2*C_out,)         accepted for API parity; mathematically cancelled by BN.
    gamma, beta: (2*C_out,)    BatchNorm affine parameters.
    """
    del bias  # exact: a pre-BN per-channel constant only shifts the batch mean
    N, C_in, L = x.shape
    C2, _, K = weight.shape
    C_out = C2 // 2
    L_out = L + 2 * padding - K + 1          # stride=1, dilation=1

    cols = N * L_out                         # N folded into the lane dim
    TL = 512 if cols >= 512 else _round_up(cols, 128)
    P = _round_up(cols, TL)                  # lane-dense, multiple of the tile width
    n_tiles = P // TL
    KC = K * C_in
    KCp = _round_up(KC, 8)                   # sublane-aligned contraction depth

    # ---- wrapper-side im2col (layout plumbing; keeps the kernel lane-aligned) ----
    xf = x.astype(jnp.float32)
    x_pad = jnp.pad(xf, ((0, 0), (0, 0), (padding, padding)))
    taps = jnp.stack([x_pad[:, :, k:k + L_out] for k in range(K)], axis=0)   # (K,N,C_in,L_out)
    xcol = jnp.transpose(taps, (0, 2, 1, 3)).reshape(KC, cols)               # row = k*C_in + i
    xcol = jnp.pad(xcol, ((0, KCp - KC), (0, P - cols)))                     # (KCp, P)

    wf = jnp.transpose(weight.astype(jnp.float32), (0, 2, 1)).reshape(C2, KC)
    wf = jnp.pad(wf, ((0, 0), (0, KCp - KC)))                                # (C2, KCp)

    params = jnp.stack([gamma.astype(jnp.float32),
                        beta.astype(jnp.float32)], axis=0).reshape(2, C2, 1)

    vmem_limit = 32 * 1024 * 1024

    # ---- pass 1: conv + per-channel sum/sumsq (reduction over tiles -> "arbitrary") ----
    cost1 = pl.CostEstimate(
        flops=2 * C2 * KCp * P,
        transcendentals=0,
        bytes_accessed=4 * (C2 * KCp + KCp * P + C2 * P + 2 * C2))
    y, stats = pl.pallas_call(
        _conv_stats_kernel,
        out_shape=(jax.ShapeDtypeStruct((C2, P), jnp.float32),
                   jax.ShapeDtypeStruct((2, C2, 1), jnp.float32)),
        grid=(n_tiles,),
        in_specs=[pl.BlockSpec((C2, KCp), lambda t: (0, 0)),
                  pl.BlockSpec((KCp, TL), lambda t: (0, t))],
        out_specs=(pl.BlockSpec((C2, TL), lambda t: (0, t)),
                   pl.BlockSpec((2, C2, 1), lambda t: (0, 0, 0))),
        compiler_params=pltpu.CompilerParams(
            dimension_semantics=("arbitrary",),
            vmem_limit_bytes=vmem_limit),
        cost_estimate=cost1,
    )(wf, xcol)

    # ---- pass 2: normalize + GLU (tiles independent -> "parallel" / megacore) ----
    cost2 = pl.CostEstimate(
        flops=6 * C2 * P,
        transcendentals=C_out * P,
        bytes_accessed=4 * (C2 * P + 2 * C2 + 2 * C2 + C_out * P))
    kern2 = functools.partial(_bn_glu_kernel, count=float(cols), c_out=C_out, eps=eps)
    out2d = pl.pallas_call(
        kern2,
        out_shape=jax.ShapeDtypeStruct((C_out, P), jnp.float32),
        grid=(n_tiles,),
        in_specs=[pl.BlockSpec((2, C2, 1), lambda t: (0, 0, 0)),
                  pl.BlockSpec((2, C2, 1), lambda t: (0, 0, 0)),
                  pl.BlockSpec((C2, TL), lambda t: (0, t))],
        out_specs=pl.BlockSpec((C_out, TL), lambda t: (0, t)),
        compiler_params=pltpu.CompilerParams(
            dimension_semantics=("parallel",),
            vmem_limit_bytes=vmem_limit),
        cost_estimate=cost2,
    )(stats, params, y)

    # Undo the lane-dense packing: (C_out, N*L_out) -> (N, C_out, L_out).
    return out2d[:, :cols].reshape(C_out, N, L_out).transpose(1, 0, 2)


def _reference(x, weight, bias, gamma, beta, padding, eps=1e-5):
    """Pure-JAX reference mirroring PyTorch Conv1d(+bias) + BatchNorm1d(train) + GLU(dim=1)."""
    y = jax.lax.conv_general_dilated(
        x, weight, window_strides=(1,), padding=[(padding, padding)],
        dimension_numbers=("NCH", "OIH", "NCH"))
    y = y + bias[None, :, None]
    mean = jnp.mean(y, axis=(0, 2), keepdims=True)
    var = jnp.mean((y - mean) ** 2, axis=(0, 2), keepdims=True)
    z = (y - mean) / jnp.sqrt(var + eps) * gamma[None, :, None] + beta[None, :, None]
    c = z.shape[1] // 2
    return z[:, :c] * jax.nn.sigmoid(z[:, c:])


if __name__ == "__main__":
    # Module config: in_channels=4, out_channels=8, kernel_size=3, padding=1 (stride=1).
    N, C_in, L = 2, 4, 16
    C_out, K, padding = 8, 3, 1
    C2 = 2 * C_out

    key = jax.random.PRNGKey(0)
    kx, kw, kb, kg, kbt = jax.random.split(key, 5)
    x = jax.random.normal(kx, (N, C_in, L), dtype=jnp.float32)
    # Conv1d weight: (2*out_channels, in_channels, kernel_size), bias: (2*out_channels,)
    fan_in = C_in * K
    bound = 1.0 / np.sqrt(fan_in)
    weight = jax.random.uniform(kw, (C2, C_in, K), jnp.float32, -bound, bound)
    bias = jax.random.uniform(kb, (C2,), jnp.float32, -bound, bound)
    # BatchNorm affine params (perturb gamma/beta so they are nontrivial)
    gamma = 1.0 + 0.1 * jax.random.normal(kg, (C2,), dtype=jnp.float32)
    beta = 0.1 * jax.random.normal(kbt, (C2,), dtype=jnp.float32)

    out = conv1d_bn_glu(x, weight, bias, gamma, beta, padding=padding)
    out = jax.block_until_ready(out)

    # Reference includes the conv bias; the kernel drops it (exactly cancelled by BN).
    ref = jax.block_until_ready(_reference(x, weight, bias, gamma, beta, padding))
    assert out.shape == (N, C_out, L), out.shape
    np.testing.assert_allclose(np.asarray(out), np.asarray(ref), rtol=1e-5, atol=1e-5)
    print("KERNEL_OK")
</pallas_src>

<mosaic_0001>
module attributes {stable_mosaic.version = 11 : i64} {
  func.func @_conv_stats_kernel(%arg0: i32, %arg1: memref<16x16xf32, #tpu.memory_space<vmem>>, %arg2: memref<16x128xf32, #tpu.memory_space<vmem>>, %arg3: memref<16x128xf32, #tpu.memory_space<vmem>>, %arg4: memref<2x16x1xf32, #tpu.memory_space<vmem>>) attributes {dimension_semantics = [#tpu.dimension_semantics<arbitrary>], iteration_bounds = array<i64: 1>, scalar_prefetch = 0 : i64, scratch_operands = 0 : i64, tpu.core_type = #tpu.core_type<tc>, window_params = [{pipeline_mode = #tpu.pipeline_mode<synchronous>, transform_indices = @transform_0, window_bounds = array<i64: 16, 16>}, {transform_indices = @transform_1, window_bounds = array<i64: 16, 128>}, {transform_indices = @transform_2, window_bounds = array<i64: 16, 128>}, {pipeline_mode = #tpu.pipeline_mode<synchronous>, transform_indices = @transform_3, window_bounds = array<i64: 2, 16, 1>}]} {
    %c0_i32 = arith.constant 0 : i32
    %0 = arith.cmpi eq, %arg0, %c0_i32 : i32
    %1 = arith.extui %0 : i1 to i32
    %c0_i32_0 = arith.constant 0 : i32
    %2 = arith.cmpi ne, %1, %c0_i32_0 : i32
    scf.if %2 {
      %cst_19 = arith.constant 0.000000e+00 : f32
      %24 = vector.broadcast %cst_19 : f32 to vector<2x16x1xf32>
      %c0_20 = arith.constant 0 : index
      %c0_21 = arith.constant 0 : index
      %c0_22 = arith.constant 0 : index
      %25 = vector.load %arg4[%c0_20, %c0_21, %c0_22] : memref<2x16x1xf32, #tpu.memory_space<vmem>>, vector<2x16x1xf32>
      tpu.vector_store %arg4[%c0_20, %c0_21, %c0_22], %24 {strides = array<i32>} : memref<2x16x1xf32, #tpu.memory_space<vmem>>, vector<2x16x1xf32>,
    } else {
    }
    %c0 = arith.constant 0 : index
    %c0_1 = arith.constant 0 : index
    %3 = vector.load %arg1[%c0, %c0_1] : memref<16x16xf32, #tpu.memory_space<vmem>>, vector<16x16xf32>
    %c0_2 = arith.constant 0 : index
    %c0_3 = arith.constant 0 : index
    %4 = vector.load %arg2[%c0_2, %c0_3] : memref<16x128xf32, #tpu.memory_space<vmem>>, vector<16x128xf32>
    %cst = arith.constant dense<0.000000e+00> : vector<16x128xf32>
    %5 = tpu.matmul %3, %4, %cst {dimension_numbers = #tpu.dot_dimension_numbers<[1], [0], [0], [1], [0, 0, 1, 1], [], []>} : vector<16x16xf32>, vector<16x128xf32>, vector<16x128xf32> -> vector<16x128xf32>
    %c0_4 = arith.constant 0 : index
    %c0_5 = arith.constant 0 : index
    %6 = vector.load %arg3[%c0_4, %c0_5] : memref<16x128xf32, #tpu.memory_space<vmem>>, vector<16x128xf32>
    tpu.vector_store %arg3[%c0_4, %c0_5], %5 {strides = array<i32>} : memref<16x128xf32, #tpu.memory_space<vmem>>, vector<16x128xf32>,
    %c0_6 = arith.constant 0 : index
    %c0_7 = arith.constant 0 : index
    %c0_8 = arith.constant 0 : index
    %7 = vector.load %arg4[%c0_6, %c0_7, %c0_8] : memref<2x16x1xf32, #tpu.memory_space<vmem>>, vector<1x16x1xf32>
    %8 = vector.shape_cast %7 : vector<1x16x1xf32> to vector<16x1xf32>
    %cst_9 = arith.constant dense<0.000000e+00> : vector<16xf32>
    %9 = vector.multi_reduction <add>, %5, %cst_9 [1] : vector<16x128xf32> to vector<16xf32>
    %10 = vector.shape_cast %9 : vector<16xf32> to vector<16x1xf32>
    %11 = arith.addf %8, %10 : vector<16x1xf32>
    %c0_10 = arith.constant 0 : index
    %c0_11 = arith.constant 0 : index
    %c0_12 = arith.constant 0 : index
    %12 = vector.load %arg4[%c0_10, %c0_11, %c0_12] : memref<2x16x1xf32, #tpu.memory_space<vmem>>, vector<1x16x1xf32>
    %13 = vector.shape_cast %12 : vector<1x16x1xf32> to vector<16x1xf32>
    %14 = vector.shape_cast %11 : vector<16x1xf32> to vector<1x16x1xf32>
    tpu.vector_store %arg4[%c0_10, %c0_11, %c0_12], %14 {strides = array<i32>} : memref<2x16x1xf32, #tpu.memory_space<vmem>>, vector<1x16x1xf32>,
    %c1 = arith.constant 1 : index
    %c0_13 = arith.constant 0 : index
    %c0_14 = arith.constant 0 : index
    %15 = vector.load %arg4[%c1, %c0_13, %c0_14] : memref<2x16x1xf32, #tpu.memory_space<vmem>>, vector<1x16x1xf32>
    %16 = vector.shape_cast %15 : vector<1x16x1xf32> to vector<16x1xf32>
    %17 = arith.mulf %5, %5 : vector<16x128xf32>
    %cst_15 = arith.constant dense<0.000000e+00> : vector<16xf32>
    %18 = vector.multi_reduction <add>, %17, %cst_15 [1] : vector<16x128xf32> to vector<16xf32>
    %19 = vector.shape_cast %18 : vector<16xf32> to vector<16x1xf32>
    %20 = arith.addf %16, %19 : vector<16x1xf32>
    %c1_16 = arith.constant 1 : index
    %c0_17 = arith.constant 0 : index
    %c0_18 = arith.constant 0 : index
    %21 = vector.load %arg4[%c1_16, %c0_17, %c0_18] : memref<2x16x1xf32, #tpu.memory_space<vmem>>, vector<1x16x1xf32>
    %22 = vector.shape_cast %21 : vector<1x16x1xf32> to vector<16x1xf32>
    %23 = vector.shape_cast %20 : vector<16x1xf32> to vector<1x16x1xf32>
    tpu.vector_store %arg4[%c1_16, %c0_17, %c0_18], %23 {strides = array<i32>} : memref<2x16x1xf32, #tpu.memory_space<vmem>>, vector<1x16x1xf32>,
    return
  }
  func.func @transform_0(%arg0: i32) -> (i32, i32) {
    %c0_i32 = arith.constant 0 : i32
    %c0_i32_0 = arith.constant 0 : i32
    %c0_i32_1 = arith.constant 0 : i32
    return %c0_i32, %c0_i32_0 : i32, i32
  }
  func.func @transform_1(%arg0: i32) -> (i32, i32) {
    %c0_i32 = arith.constant 0 : i32
    %c0_i32_0 = arith.constant 0 : i32
    return %c0_i32, %arg0 : i32, i32
  }
  func.func @transform_2(%arg0: i32) -> (i32, i32) {
    %c0_i32 = arith.constant 0 : i32
    %c0_i32_0 = arith.constant 0 : i32
    return %c0_i32, %arg0 : i32, i32
  }
  func.func @transform_3(%arg0: i32) -> (i32, i32, i32) {
    %c0_i32 = arith.constant 0 : i32
    %c0_i32_0 = arith.constant 0 : i32
    %c0_i32_1 = arith.constant 0 : i32
    %c0_i32_2 = arith.constant 0 : i32
    return %c0_i32, %c0_i32_0, %c0_i32_1 : i32, i32, i32
  }
}

</mosaic_0001>

<llo_original>
// kernel: tpu_custom_call.1
$region0: #{tpu_custom_call.1}
  #allocation0 [shape = 'u32[]', space=smem, size = 0x4, offset = 0x4, fixed_abs, tag = 'smem constant byte address 0x4 - core index']
  #allocation1 [shape = 'u32[72,128]{1,0:T(1,128)}', space=vmem, size = 0x9000, scoped, tag = 'internal scratch']
  %s0 = inlined_call_operand.hbm [shape: f32[16,16], index: 0, kind: input, shape index: {}]
  %s1 = inlined_call_operand.hbm [shape: f32[16,128], index: 1, kind: input, shape index: {}]
  %s2 = inlined_call_operand.hbm [shape: f32[16,128], index: 2, kind: output, shape index: {0}]
  %s3 = inlined_call_operand.vmem [shape: f32[2,16,1], index: 3, kind: output, shape index: {1}]
  %4 = xla_tuple %s2, %s3
  %s5 = sld [smem:[#allocation0]]
  $region38: #{tpu_custom_call.1} parent=0
    _
  %s7 = ssub.s32 1, %s5
  %s8 = scalar_select 0, %s7, %s5
  $region1: #{tpu_custom_call.1} parent=0
    #allocation2 [shape = 'u8[8192]{0}', space=vmem, size = 0x2000, scoped, tag = 'input window, operand 0, single buffered']
    #allocation3 [shape = 's32[1]{0}', space=sflag, size = 0x4, scoped, tag = 'scoped memory for tpu_custom_call.1']
    #allocation4 [shape = 's32[1]{0}', space=sflag, size = 0x4, scoped, tag = 'scoped memory for tpu_custom_call.1']
    #allocation5 [shape = 'u8[8192]{0}', space=vmem, size = 0x2000, scoped, tag = 'input window, operand 1, single buffered']
    #allocation6 [shape = 's32[1]{0}', space=sflag, size = 0x4, scoped, tag = 'scoped memory for tpu_custom_call.1']
    #allocation7 [shape = 'u8[8192]{0}', space=vmem, size = 0x2000, scoped, tag = 'output window, operand 0, single buffered']
    %9 = vsyncpa [#allocation3], 0
    %10 = vsyncpa [#allocation6], 0
    %11 = vsyncpa [#allocation4], 0
    // Predicated region
    $region2: #{tpu_custom_call.1} parent=1 // pred_check
      _
    $region3: #{tpu_custom_call.1} parent=1 // pred_check_branch
      %13 = sbr.rel (0) target = $region5
    $region4: #{tpu_custom_call.1} parent=1 // pred_region
      %15 = vsyncadd [#allocation3], 0
      %s16 = sshll.u32 %s0, 4
      %s17 = int_to_ptr.hbm [resolvable:$true] %s16
      %s18 = sshll.u32 [#allocation2], 4
      %s19 = int_to_ptr.vmem [resolvable:$true] %s18
      %24 = dma.hbm_to_vmem [thread:$0]  %s17, 256, %s19, [#allocation3], 128, 128, 8
    $region5: #{tpu_custom_call.1} parent=1 // pred_fallthru
      _
    // Predicated region
    $region6: #{tpu_custom_call.1} parent=1 // pred_check
      _
    $region7: #{tpu_custom_call.1} parent=1 // pred_check_branch
      %26 = sbr.rel (0) target = $region9
    $region8: #{tpu_custom_call.1} parent=1 // pred_region
      %28 = vsyncadd [#allocation6], 0
      %s29 = sshll.u32 %s1, 4
      %s30 = int_to_ptr.hbm [resolvable:$true] %s29
      %s31 = sshll.u32 [#allocation5], 4
      %s32 = int_to_ptr.vmem [resolvable:$true] %s31
      %37 = dma.hbm_to_vmem [thread:$0]  %s30, 256, %s32, [#allocation6], 128, 128, 8
    $region9: #{tpu_custom_call.1} parent=1 // pred_fallthru
      _
    // Predicated region
    $region10: #{tpu_custom_call.1} parent=1 // pred_check
      _
    $region11: #{tpu_custom_call.1} parent=1 // pred_check_branch
      %39 = sbr.rel (0) target = $region13
    $region12: #{tpu_custom_call.1} parent=1 // pred_region
      %41 = dma.done [#allocation3], 256
    $region13: #{tpu_custom_call.1} parent=1 // pred_fallthru
      _
    // Predicated region
    $region14: #{tpu_custom_call.1} parent=1 // pred_check
      _
    $region15: #{tpu_custom_call.1} parent=1 // pred_check_branch
      %43 = sbr.rel (0) target = $region17
    $region16: #{tpu_custom_call.1} parent=1 // pred_region
      %45 = dma.done [#allocation6], 256
    $region17: #{tpu_custom_call.1} parent=1 // pred_fallthru
      _
    %p46 = scmp.eq.s32.totalorder 0, 0
    // Predicated region
    $region18: #{tpu_custom_call.1} parent=1 // pred_check
      %p47 = pneg %p46
    $region19: #{tpu_custom_call.1} parent=1 // pred_check_branch
      %49 = sbr.rel (%p47) target = $region21
    $region20: #{tpu_custom_call.1} parent=1 // pred_region
      %vm50 = vcmask 7168
      %51 = vst.msk [vmem:[%s3] sm:$0xff] %vm50, 0.0
      %52 = vst.msk [vmem:[%s3 + $0x8] sm:$0xff] %vm50, 0.0
      %53 = vst.msk [vmem:[%s3 + $0x10] sm:$0xff] %vm50, 0.0
      %54 = vst.msk [vmem:[%s3 + $0x18] sm:$0xff] %vm50, 0.0
    $region21: #{tpu_custom_call.1} parent=1 // pred_fallthru
      _
    %v55 = vld [vmem:[#allocation2] sm:$0xff]
    %v56 = vld [vmem:[#allocation2 + $0x8] sm:$0xff]
    %v57 = vld [vmem:[#allocation5] sm:$0xff]
    %v58 = vld [vmem:[#allocation5 + $0x8] sm:$0xff]
    %vm59 = vcmask 130048
    %v61 = vsel %vm59, %v55, 0
    %v64 = vsel %vm59, %v56, 0
    %66 = vmatpush.msra.mxu0 0.0
    %67 = vmatpush.msra.mxu0 0.0
    %68 = vmatpush.msra.mxu0 0.0
    %69 = vmatpush.msra.mxu0 0.0
    %70 = vmatpush.msra.mxu0 0.0
    %71 = vmatpush.msra.mxu0 0.0
    %72 = vmatpush.msra.mxu0 0.0
    %73 = vmatpush.msra.mxu0 0.0
    %74 = vmatpush.msra.mxu0 0.0
    %75 = vmatpush.msra.mxu0 0.0
    %76 = vmatpush.msra.mxu0 0.0
    %77 = vmatpush.msra.mxu0 0.0
    %78 = vmatpush.msra.mxu0 0.0
    %79 = vmatpush.msra.mxu0 0.0
    %80 = vmatpush.msra.mxu0 %v58
    %81 = vmatpush.msra.mxu0 %v57
    %82 = vmatmul.f32.gmra.mxu0 %v61
    %v83 = vpop.f32.mrf.mxu0
    %v84 = vadd.f32 0.0, %v83
    %85 = vmatmul.f32.gmra.mxu0 %v64
    %v86 = vpop.f32.mrf.mxu0
    %v87 = vadd.f32 0.0, %v86
    %88 = vdwg.mxu0
    %89 = vst [vmem:[#allocation7] sm:$0xff] %v84
    %90 = vst [vmem:[#allocation7 + $0x8] sm:$0xff] %v87
    %v91 = vld [vmem:[%s3] sm:$0xff]
    %v92 = vld [vmem:[%s3 + $0x8] sm:$0xff]
    %93 = vadd.xlane.f32.xlu0 %v84
    %v94 = vpop.xlane.xlu0 %93
    %95 = vadd.xlane.f32.xlu0 %v87
    %v96 = vpop.xlane.xlu0 %95
    %v97 = vadd.f32 %v91, %v94
    %v98 = vadd.f32 %v92, %v96
    %vm99 = vcmask 7168
    %100 = vst.msk [vmem:[%s3] sm:$0xff] %vm99, %v97
    %101 = vst.msk [vmem:[%s3 + $0x8] sm:$0xff] %vm99, %v98
    %s102 = scalar_lea.vmem %s3, 16
    %v103 = vld [vmem:[%s102] sm:$0xff]
    %v104 = vld [vmem:[%s102 + $0x8] sm:$0xff]
    %v105 = vmul.f32 %v84, %v84
    %v106 = vmul.f32 %v87, %v87
    %107 = vadd.xlane.f32.xlu0 %v105
    %v108 = vpop.xlane.xlu0 %107
    %109 = vadd.xlane.f32.xlu0 %v106
    %v110 = vpop.xlane.xlu0 %109
    %v111 = vadd.f32 %v103, %v108
    %v112 = vadd.f32 %v104, %v110
    %113 = vst.msk [vmem:[%s102] sm:$0xff] %vm99, %v111
    %114 = vst.msk [vmem:[%s102 + $0x8] sm:$0xff] %vm99, %v112
    // Predicated region
    $region22: #{tpu_custom_call.1} parent=1 // pred_check
      _
    $region23: #{tpu_custom_call.1} parent=1 // pred_check_branch
      %116 = sbr.rel (0) target = $region25
    $region24: #{tpu_custom_call.1} parent=1 // pred_region
      %118 = vsyncadd [#allocation4], 0
      %s119 = sshll.u32 [#allocation7], 4
      %s120 = int_to_ptr.vmem [resolvable:$true] %s119
      %s121 = sshll.u32 %s2, 4
      %s122 = int_to_ptr.hbm [resolvable:$true] %s121
      %127 = dma.vmem_to_hbm [thread:$0]  %s120, 256, %s122, [#allocation4], 128, 128, 8
    $region25: #{tpu_custom_call.1} parent=1 // pred_fallthru
      _
    // Predicated region
    $region26: #{tpu_custom_call.1} parent=1 // pred_check
      _
    $region27: #{tpu_custom_call.1} parent=1 // pred_check_branch
      %129 = sbr.rel (0) target = $region29
    $region28: #{tpu_custom_call.1} parent=1 // pred_region
      _
    $region29: #{tpu_custom_call.1} parent=1 // pred_fallthru
      _
    // Predicated region
    $region30: #{tpu_custom_call.1} parent=1 // pred_check
      _
    $region31: #{tpu_custom_call.1} parent=1 // pred_check_branch
      %131 = sbr.rel (0) target = $region33
    $region32: #{tpu_custom_call.1} parent=1 // pred_region
      %133 = dma.done [#allocation4], 256
    $region33: #{tpu_custom_call.1} parent=1 // pred_fallthru
      _
    // Predicated region
    $region34: #{tpu_custom_call.1} parent=1 // pred_check
      _
    $region35: #{tpu_custom_call.1} parent=1 // pred_check_branch
      %135 = sbr.rel (0) target = $region37
    $region36: #{tpu_custom_call.1} parent=1 // pred_region
      _
    $region37: #{tpu_custom_call.1} parent=1 // pred_fallthru
      _
    %136 = vsyncpa [#allocation3], 1
    %137 = vsyncpa [#allocation6], 1
    %138 = vsyncpa [#allocation4], 1

</llo_original>
